<compile_context>
chip_gen: v7x
topology: tpu7x:2x2x1
jax: 0.10.0
libtpu: 0.0.40
codegen_flags: <defaults>
</compile_context>

<pallas_src>
import functools
import math

import jax
import jax.numpy as jnp
from jax.experimental import pallas as pl
from jax.experimental.pallas import tpu as pltpu

_LANES = 128


def _copy_kernel(x_ref, o_ref):
    # Lane-dense, unmasked (tile_rows, 128) VMEM -> VMEM copy of one block.
    o_ref[...] = x_ref[...]


def _resolve_out_shape(batch, shape, total):
    """torch .view semantics: keep batch dim, resolve at most one -1."""
    shape = tuple(int(s) for s in shape)
    neg = [i for i, s in enumerate(shape) if s == -1]
    known = batch
    for s in shape:
        if s != -1:
            known *= s
    if neg:
        assert len(neg) == 1, "at most one -1 allowed in target shape"
        shape = tuple((total // known) if s == -1 else s for s in shape)
    out = (batch,) + shape
    assert math.prod(out) == total, f"cannot view {total} elements as {out}"
    return out


def _tile_rows(rows, itemsize):
    """Rows per block: target ~2 MiB blocks.

    2 MiB/block amortizes the ~0.35 us per-grid-step overhead (near-roofline
    copy), and double-buffered in+out is ~8 MiB resident -> safe under v5e's
    16 MiB scoped-VMEM default and v6e/v7x budgets with no vmem override.
    """
    sub = {4: 8, 2: 16, 1: 32}.get(itemsize, 8)  # sublane pack per dtype
    target = (2 * 1024 * 1024) // (_LANES * itemsize)
    target = max(sub, (target // sub) * sub)
    if rows <= target:
        return rows   # single full-extent block: always a legal block shape
    return target     # multiple of the sublane pack; tail handled as partial block


@functools.partial(jax.jit, static_argnames=("out_shape",))
def _pallas_materialize(x, *, out_shape):
    """Realize the reshaped output via a lane-dense tiled Pallas copy.

    Requires total % 128 == 0 so the flat data maps exactly onto a
    (rows, 128) slab with no wrapper-side pad/slice.  Any partial *row* tail
    is handled by the pl.cdiv grid (Pallas masks the last block's writeback).
    """
    total = math.prod(x.shape)
    rows = total // _LANES
    itemsize = jnp.dtype(x.dtype).itemsize
    tr = _tile_rows(rows, itemsize)

    x2d = x.reshape(rows, _LANES)  # metadata-only under jit
    y2d = pl.pallas_call(
        _copy_kernel,
        out_shape=jax.ShapeDtypeStruct((rows, _LANES), x.dtype),
        grid=(pl.cdiv(rows, tr),),
        in_specs=[pl.BlockSpec((tr, _LANES), lambda i: (i, 0))],
        out_specs=pl.BlockSpec((tr, _LANES), lambda i: (i, 0)),
        # Output buffer aliases the input slab: no second allocation / copy
        # is materialized when the caller donates the input.
        input_output_aliases={0: 0},
        compiler_params=pltpu.CompilerParams(
            # Independent tiles: shard across v7x's 2 TensorCores
            # (no-op on single-TC v5e/v6e).
            dimension_semantics=("parallel",),
        ),
    )(x2d)
    return y2d.reshape(out_shape)  # the actual "reshape" is metadata-only


def reshape(x: jax.Array, *shape, materialize: bool = False) -> jax.Array:
    """Pallas equivalent of Reshape.forward: input.view(input.shape[0], *shape).

    Default: metadata-only (zero HBM traffic), matching torch .view semantics.
    materialize=True: realize the output buffer with the tiled Pallas copy.
    """
    total = math.prod(x.shape)
    out_shape = _resolve_out_shape(x.shape[0], shape, total)

    if not materialize:
        return jnp.reshape(x, out_shape)  # metadata only; also the small-input fast path
    if total % _LANES != 0:
        # TODO(synk): in-kernel masked tail store for totals not divisible by
        # 128; the old jnp.pad + slice path (3x HBM traffic) was removed, so
        # fall back to the metadata reshape here.
        return jnp.reshape(x, out_shape)
    return _pallas_materialize(x, out_shape=out_shape)


class Reshape:
    """Mirror of the PyTorch module: Reshape(*shape)(x) == x.view(x.shape[0], *shape)."""

    def __init__(self, *shape, materialize: bool = False):
        self.shape = shape
        self.materialize = materialize

    def __call__(self, x):
        return reshape(x, *self.shape, materialize=self.materialize)


if __name__ == "__main__":
    key = jax.random.PRNGKey(0)
    # NCHW-style input, as the Sequential usage implies.
    x = jax.random.normal(key, (2, 4, 16, 16), dtype=jnp.float32)

    # Default path: metadata-only (fastest; matches torch .view semantics).
    y_meta = Reshape(16, 64)(x)
    jax.block_until_ready(y_meta)
    assert y_meta.shape == (2, 16, 64) and y_meta.dtype == x.dtype
    assert bool(jnp.all(y_meta == x.reshape(2, 16, 64)))

    # Gated Pallas path: realizes the output via the tiled, aliased copy kernel.
    y = reshape(x, 16, 64, materialize=True)
    jax.block_until_ready(y)
    assert y.shape == (2, 16, 64) and y.dtype == x.dtype
    assert bool(jnp.all(y == x.reshape(2, 16, 64)))

    # -1 resolution (flatten per batch), Pallas path.
    y2 = reshape(x, -1, materialize=True)
    jax.block_until_ready(y2)
    assert y2.shape == (2, 1024)
    assert bool(jnp.all(y2 == x.reshape(2, 1024)))

    # Total not a multiple of 128: metadata fallback (no pad/slice round trips).
    x_odd = jax.random.normal(jax.random.PRNGKey(1), (2, 3, 5), dtype=jnp.float32)
    y3 = reshape(x_odd, 15, materialize=True)
    jax.block_until_ready(y3)
    assert y3.shape == (2, 15)
    assert bool(jnp.all(y3 == x_odd.reshape(2, 15)))

    print("KERNEL_OK")
</pallas_src>

<mosaic_0001>
module attributes {stable_mosaic.version = 11 : i64} {
  func.func @_copy_kernel(%arg0: i32, %arg1: memref<16x128xf32, #tpu.memory_space<vmem>>, %arg2: memref<16x128xf32, #tpu.memory_space<vmem>>) attributes {dimension_semantics = [#tpu.dimension_semantics<parallel>], iteration_bounds = array<i64: 1>, scalar_prefetch = 0 : i64, scratch_operands = 0 : i64, tpu.core_type = #tpu.core_type<tc>, window_params = [{transform_indices = @transform_0, window_bounds = array<i64: 16, 128>}, {transform_indices = @transform_1, window_bounds = array<i64: 16, 128>}]} {
    %c0 = arith.constant 0 : index
    %c0_0 = arith.constant 0 : index
    %0 = vector.load %arg1[%c0, %c0_0] : memref<16x128xf32, #tpu.memory_space<vmem>>, vector<16x128xf32>
    %c0_1 = arith.constant 0 : index
    %c0_2 = arith.constant 0 : index
    %1 = vector.load %arg2[%c0_1, %c0_2] : memref<16x128xf32, #tpu.memory_space<vmem>>, vector<16x128xf32>
    tpu.vector_store %arg2[%c0_1, %c0_2], %0 {strides = array<i32>} : memref<16x128xf32, #tpu.memory_space<vmem>>, vector<16x128xf32>,
    return
  }
  func.func @transform_0(%arg0: i32) -> (i32, i32) {
    %c0_i32 = arith.constant 0 : i32
    %c0_i32_0 = arith.constant 0 : i32
    return %arg0, %c0_i32 : i32, i32
  }
  func.func @transform_1(%arg0: i32) -> (i32, i32) {
    %c0_i32 = arith.constant 0 : i32
    %c0_i32_0 = arith.constant 0 : i32
    return %arg0, %c0_i32 : i32, i32
  }
}

</mosaic_0001>

<llo_original>
// kernel: _pallas_materialize.1
$region0: #{_pallas_materialize.1}
  #allocation0 [shape = 'u32[]', space=smem, size = 0x4, offset = 0x4, fixed_abs, tag = 'smem constant byte address 0x4 - core index']
  #allocation1 [shape = 'u32[144,128]{1,0:T(1,128)}', space=vmem, size = 0x12000, scoped, tag = 'internal scratch']
  %s0 = inlined_call_operand.vmem [shape: f32[16,128], index: 0, kind: input, shape index: {}, may-alias: {0,1}]
  %s1 = inlined_call_operand.vmem [shape: f32[16,128], index: 1, kind: output, shape index: {}, may-alias: {0,1}]
  %s2 = sld [smem:[#allocation0]]
  $region14: #{_pallas_materialize.1} parent=0
    _
  %s4 = ssub.s32 1, %s2
  %s5 = scalar_select 0, %s4, %s2
  // Predicated region
  $region2: #{_pallas_materialize.1} parent=0 // pred_check
    _
  $region3: #{_pallas_materialize.1} parent=0 // pred_check_branch
    %7 = sbr.rel (0) target = $region5
  $region4: #{_pallas_materialize.1} parent=0 // pred_region
    _
  $region5: #{_pallas_materialize.1} parent=0 // pred_fallthru
    _
  %v8 = vld [vmem:[%s0] sm:$0xff]
  %v9 = vld [vmem:[%s0 + $0x8] sm:$0xff]
  %10 = vst [vmem:[%s1] sm:$0xff] %v8
  %11 = vst [vmem:[%s1 + $0x8] sm:$0xff] %v9
  // Predicated region
  $region6: #{_pallas_materialize.1} parent=0 // pred_check
    _
  $region7: #{_pallas_materialize.1} parent=0 // pred_check_branch
    %13 = sbr.rel (0) target = $region9
  $region8: #{_pallas_materialize.1} parent=0 // pred_region
    _
  $region9: #{_pallas_materialize.1} parent=0 // pred_fallthru
    _
  // Predicated region
  $region10: #{_pallas_materialize.1} parent=0 // pred_check
    _
  $region11: #{_pallas_materialize.1} parent=0 // pred_check_branch
    %15 = sbr.rel (0) target = $region13
  $region12: #{_pallas_materialize.1} parent=0 // pred_region
    _
  $region13: #{_pallas_materialize.1} parent=0 // pred_fallthru
    _

</llo_original>
